<compile_context>
chip_gen: v7x
topology: tpu7x:2x2x1
jax: 0.10.0
libtpu: 0.0.40
codegen_flags: <defaults>
</compile_context>

<pallas_src>
import functools

import jax
import jax.numpy as jnp
from jax.experimental import pallas as pl
from jax.experimental.pallas import tpu as pltpu


def _actor_kernel(x_ref, w1_ref, b1_ref, w2_ref, b2_ref, whf_ref, bhf_ref,
                  out_ref, *, num_clusters, period_max):
    # Shared trunk: two Linear + ReLU.
    h1 = jnp.maximum(
        jnp.dot(x_ref[...], w1_ref[...], preferred_element_type=jnp.float32)
        + b1_ref[...], 0.0)
    h2 = jnp.maximum(
        jnp.dot(h1, w2_ref[...], preferred_element_type=jnp.float32)
        + b2_ref[...], 0.0)

    # All cluster heads in one wide matmul: (B, H) @ (H, C*P) -> (B, C*P).
    z_all = jnp.dot(h2, whf_ref[...],
                    preferred_element_type=jnp.float32) + bhf_ref[...]

    inv_p = 1.0 / float(period_max)
    outs = []
    for c in range(num_clusters):                      # static loop, static slices
        lo = c * period_max
        zc = z_all[:, lo:lo + period_max]              # (B, P), lane-aligned

        # LayerNorm(eps=0, no affine) with fused statistics (single pass).
        s1 = jnp.sum(zc, axis=-1, keepdims=True)
        s2 = jnp.sum(zc * zc, axis=-1, keepdims=True)
        mean = s1 * inv_p
        var = s2 * inv_p - mean * mean                 # biased variance, eps = 0
        ln = (zc - mean) * jax.lax.rsqrt(var)

        # output_activation chosen as softmax over the last dim.
        m = jnp.max(ln, axis=-1, keepdims=True)
        e = jnp.exp(ln - m)
        denom = jnp.sum(e, axis=-1, keepdims=True)
        outs.append(e * pl.reciprocal(denom, approx=False))

    # Single lane-dense store of the full (B, C*P) result.
    out_ref[...] = jnp.concatenate(outs, axis=-1)


@functools.partial(jax.jit, static_argnames=("num_clusters", "period_max"))
def actor_forward(x, w1, b1, w2, b2, wh, bh, *, num_clusters, period_max):
    B, _ = x.shape
    H = w1.shape[1]          # 128
    C, P = num_clusters, period_max

    # Flatten the per-cluster heads so the kernel does one wide matmul.
    # wh_flat[:, c*P:(c+1)*P] == wh[c], bh_flat[0, c*P:(c+1)*P] == bh[c, 0].
    wh_flat = jnp.transpose(wh, (1, 0, 2)).reshape(H, C * P)
    bh_flat = bh.reshape(1, C * P)

    kernel = functools.partial(_actor_kernel, num_clusters=C, period_max=P)

    vmem_spec = pl.BlockSpec(memory_space=pltpu.MemorySpace.VMEM)
    return pl.pallas_call(
        kernel,
        out_shape=jax.ShapeDtypeStruct((B, C * P), jnp.float32),
        in_specs=[vmem_spec] * 7,
        out_specs=vmem_spec,
        compiler_params=pltpu.CompilerParams(
            vmem_limit_bytes=32 * 1024 * 1024),
    )(x, w1, b1, w2, b2, wh_flat, bh_flat)


def actor_reference(x, w1, b1, w2, b2, wh, bh):
    """Pure-JAX reference mirroring the PyTorch forward (two-pass LN stats)."""
    h1 = jax.nn.relu(x @ w1 + b1)
    h2 = jax.nn.relu(h1 @ w2 + b2)
    outs = []
    for c in range(wh.shape[0]):
        z = h2 @ wh[c] + bh[c, 0]
        mean = jnp.mean(z, axis=-1, keepdims=True)
        var = jnp.mean((z - mean) ** 2, axis=-1, keepdims=True)
        ln = (z - mean) / jnp.sqrt(var)            # eps = 0 as in the module
        outs.append(jax.nn.softmax(ln, axis=-1))   # output_activation = softmax(dim=-1)
    return jnp.concatenate(outs, axis=1)


def _init_params(key, input_dim, hidden, num_clusters, period_max):
    """Deterministic PyTorch-style (uniform +/- 1/sqrt(fan_in)) init."""
    ks = jax.random.split(key, 6)
    def u(k, shape, fan_in):
        bound = 1.0 / jnp.sqrt(float(fan_in))
        return jax.random.uniform(k, shape, jnp.float32, -bound, bound)
    w1 = u(ks[0], (input_dim, hidden), input_dim)
    b1 = u(ks[1], (1, hidden), input_dim)
    w2 = u(ks[2], (hidden, hidden), hidden)
    b2 = u(ks[3], (1, hidden), hidden)
    wh = u(ks[4], (num_clusters, hidden, period_max), hidden)
    bh = u(ks[5], (num_clusters, 1, period_max), hidden)
    return w1, b1, w2, b2, wh, bh


if __name__ == "__main__":
    # Small, TPU-friendly shapes consistent with the module.
    # NOTE: for real deployments, batch multiple Actor evaluations into one
    # call (larger B) -- at B=8 the MXU is almost entirely idle.
    B, INPUT_DIM, HIDDEN = 8, 32, 128
    NUM_CLUSTERS, PERIOD_MAX = 3, 128

    key = jax.random.PRNGKey(0)
    k_x, k_p = jax.random.split(key)
    x = jax.random.normal(k_x, (B, INPUT_DIM), jnp.float32)
    w1, b1, w2, b2, wh, bh = _init_params(k_p, INPUT_DIM, HIDDEN,
                                          NUM_CLUSTERS, PERIOD_MAX)

    out = actor_forward(x, w1, b1, w2, b2, wh, bh,
                        num_clusters=NUM_CLUSTERS, period_max=PERIOD_MAX)
    out = jax.block_until_ready(out)

    ref = actor_reference(x, w1, b1, w2, b2, wh, bh)
    assert out.shape == (B, NUM_CLUSTERS * PERIOD_MAX)
    assert jnp.allclose(out, ref, atol=1e-5, rtol=1e-5), "mismatch vs reference"

    # TODO(synk): `output_activation` is a constructor argument in the PyTorch
    # module; softmax(dim=-1) is the concrete choice implemented here.
    print("KERNEL_OK")
</pallas_src>

<mosaic_0001>
module attributes {stable_mosaic.version = 11 : i64} {
  func.func @_actor_kernel(%arg0: memref<8x32xf32, #tpu.memory_space<vmem>>, %arg1: memref<32x128xf32, #tpu.memory_space<vmem>>, %arg2: memref<1x128xf32, #tpu.memory_space<vmem>>, %arg3: memref<128x128xf32, #tpu.memory_space<vmem>>, %arg4: memref<1x128xf32, #tpu.memory_space<vmem>>, %arg5: memref<128x384xf32, #tpu.memory_space<vmem>>, %arg6: memref<1x384xf32, #tpu.memory_space<vmem>>, %arg7: memref<8x384xf32, #tpu.memory_space<vmem>>) attributes {dimension_semantics = [], scalar_prefetch = 0 : i64, scratch_operands = 0 : i64, tpu.core_type = #tpu.core_type<tc>} {
    %c0 = arith.constant 0 : index
    %c0_0 = arith.constant 0 : index
    %0 = vector.load %arg0[%c0, %c0_0] : memref<8x32xf32, #tpu.memory_space<vmem>>, vector<8x32xf32>
    %c0_1 = arith.constant 0 : index
    %c0_2 = arith.constant 0 : index
    %1 = vector.load %arg1[%c0_1, %c0_2] : memref<32x128xf32, #tpu.memory_space<vmem>>, vector<32x128xf32>
    %cst = arith.constant dense<0.000000e+00> : vector<8x128xf32>
    %2 = tpu.matmul %0, %1, %cst {dimension_numbers = #tpu.dot_dimension_numbers<[1], [0], [0], [1], [0, 0, 1, 1], [], []>} : vector<8x32xf32>, vector<32x128xf32>, vector<8x128xf32> -> vector<8x128xf32>
    %c0_3 = arith.constant 0 : index
    %c0_4 = arith.constant 0 : index
    %3 = vector.load %arg2[%c0_3, %c0_4] : memref<1x128xf32, #tpu.memory_space<vmem>>, vector<1x128xf32>
    %4 = vector.broadcast %3 : vector<1x128xf32> to vector<8x128xf32>
    %5 = arith.addf %2, %4 : vector<8x128xf32>
    %cst_5 = arith.constant 0.000000e+00 : f32
    %6 = vector.broadcast %cst_5 : f32 to vector<8x128xf32>
    %7 = arith.maximumf %5, %6 : vector<8x128xf32>
    %c0_6 = arith.constant 0 : index
    %c0_7 = arith.constant 0 : index
    %8 = vector.load %arg3[%c0_6, %c0_7] : memref<128x128xf32, #tpu.memory_space<vmem>>, vector<128x128xf32>
    %cst_8 = arith.constant dense<0.000000e+00> : vector<8x128xf32>
    %9 = tpu.matmul %7, %8, %cst_8 {dimension_numbers = #tpu.dot_dimension_numbers<[1], [0], [0], [1], [0, 0, 1, 1], [], []>} : vector<8x128xf32>, vector<128x128xf32>, vector<8x128xf32> -> vector<8x128xf32>
    %c0_9 = arith.constant 0 : index
    %c0_10 = arith.constant 0 : index
    %10 = vector.load %arg4[%c0_9, %c0_10] : memref<1x128xf32, #tpu.memory_space<vmem>>, vector<1x128xf32>
    %11 = vector.broadcast %10 : vector<1x128xf32> to vector<8x128xf32>
    %12 = arith.addf %9, %11 : vector<8x128xf32>
    %cst_11 = arith.constant 0.000000e+00 : f32
    %13 = vector.broadcast %cst_11 : f32 to vector<8x128xf32>
    %14 = arith.maximumf %12, %13 : vector<8x128xf32>
    %c0_12 = arith.constant 0 : index
    %c0_13 = arith.constant 0 : index
    %15 = vector.load %arg5[%c0_12, %c0_13] : memref<128x384xf32, #tpu.memory_space<vmem>>, vector<128x384xf32>
    %cst_14 = arith.constant dense<0.000000e+00> : vector<8x384xf32>
    %16 = tpu.matmul %14, %15, %cst_14 {dimension_numbers = #tpu.dot_dimension_numbers<[1], [0], [0], [1], [0, 0, 1, 1], [], []>} : vector<8x128xf32>, vector<128x384xf32>, vector<8x384xf32> -> vector<8x384xf32>
    %c0_15 = arith.constant 0 : index
    %c0_16 = arith.constant 0 : index
    %17 = vector.load %arg6[%c0_15, %c0_16] : memref<1x384xf32, #tpu.memory_space<vmem>>, vector<1x384xf32>
    %18 = vector.broadcast %17 : vector<1x384xf32> to vector<8x384xf32>
    %19 = arith.addf %16, %18 : vector<8x384xf32>
    %20 = vector.extract_strided_slice %19 {offsets = [0, 0], sizes = [8, 128], strides = [1, 1]} : vector<8x384xf32> to vector<8x128xf32>
    %cst_17 = arith.constant dense<0.000000e+00> : vector<8xf32>
    %21 = vector.multi_reduction <add>, %20, %cst_17 [1] : vector<8x128xf32> to vector<8xf32>
    %22 = vector.shape_cast %21 : vector<8xf32> to vector<8x1xf32>
    %23 = arith.mulf %20, %20 : vector<8x128xf32>
    %cst_18 = arith.constant dense<0.000000e+00> : vector<8xf32>
    %24 = vector.multi_reduction <add>, %23, %cst_18 [1] : vector<8x128xf32> to vector<8xf32>
    %25 = vector.shape_cast %24 : vector<8xf32> to vector<8x1xf32>
    %cst_19 = arith.constant 7.812500e-03 : f32
    %26 = vector.broadcast %cst_19 : f32 to vector<8x1xf32>
    %27 = arith.mulf %22, %26 : vector<8x1xf32>
    %cst_20 = arith.constant 7.812500e-03 : f32
    %28 = vector.broadcast %cst_20 : f32 to vector<8x1xf32>
    %29 = arith.mulf %25, %28 : vector<8x1xf32>
    %30 = arith.mulf %27, %27 : vector<8x1xf32>
    %31 = arith.subf %29, %30 : vector<8x1xf32>
    %32 = vector.broadcast %27 : vector<8x1xf32> to vector<8x128xf32>
    %33 = arith.subf %20, %32 : vector<8x128xf32>
    %34 = math.rsqrt %31 : vector<8x1xf32>
    %35 = vector.broadcast %34 : vector<8x1xf32> to vector<8x128xf32>
    %36 = arith.mulf %33, %35 : vector<8x128xf32>
    %cst_21 = arith.constant dense<0xFF800000> : vector<8xf32>
    %37 = vector.multi_reduction <maximumf>, %36, %cst_21 [1] : vector<8x128xf32> to vector<8xf32>
    %38 = vector.shape_cast %37 : vector<8xf32> to vector<8x1xf32>
    %39 = vector.broadcast %38 : vector<8x1xf32> to vector<8x128xf32>
    %40 = arith.subf %36, %39 : vector<8x128xf32>
    %41 = math.exp %40 : vector<8x128xf32>
    %cst_22 = arith.constant dense<0.000000e+00> : vector<8xf32>
    %42 = vector.multi_reduction <add>, %41, %cst_22 [1] : vector<8x128xf32> to vector<8xf32>
    %43 = vector.shape_cast %42 : vector<8xf32> to vector<8x1xf32>
    %44 = tpu.reciprocal %43 : vector<8x1xf32> -> vector<8x1xf32>
    %45 = vector.broadcast %44 : vector<8x1xf32> to vector<8x128xf32>
    %46 = arith.mulf %41, %45 : vector<8x128xf32>
    %47 = vector.extract_strided_slice %19 {offsets = [0, 128], sizes = [8, 128], strides = [1, 1]} : vector<8x384xf32> to vector<8x128xf32>
    %cst_23 = arith.constant dense<0.000000e+00> : vector<8xf32>
    %48 = vector.multi_reduction <add>, %47, %cst_23 [1] : vector<8x128xf32> to vector<8xf32>
    %49 = vector.shape_cast %48 : vector<8xf32> to vector<8x1xf32>
    %50 = arith.mulf %47, %47 : vector<8x128xf32>
    %cst_24 = arith.constant dense<0.000000e+00> : vector<8xf32>
    %51 = vector.multi_reduction <add>, %50, %cst_24 [1] : vector<8x128xf32> to vector<8xf32>
    %52 = vector.shape_cast %51 : vector<8xf32> to vector<8x1xf32>
    %cst_25 = arith.constant 7.812500e-03 : f32
    %53 = vector.broadcast %cst_25 : f32 to vector<8x1xf32>
    %54 = arith.mulf %49, %53 : vector<8x1xf32>
    %cst_26 = arith.constant 7.812500e-03 : f32
    %55 = vector.broadcast %cst_26 : f32 to vector<8x1xf32>
    %56 = arith.mulf %52, %55 : vector<8x1xf32>
    %57 = arith.mulf %54, %54 : vector<8x1xf32>
    %58 = arith.subf %56, %57 : vector<8x1xf32>
    %59 = vector.broadcast %54 : vector<8x1xf32> to vector<8x128xf32>
    %60 = arith.subf %47, %59 : vector<8x128xf32>
    %61 = math.rsqrt %58 : vector<8x1xf32>
    %62 = vector.broadcast %61 : vector<8x1xf32> to vector<8x128xf32>
    %63 = arith.mulf %60, %62 : vector<8x128xf32>
    %cst_27 = arith.constant dense<0xFF800000> : vector<8xf32>
    %64 = vector.multi_reduction <maximumf>, %63, %cst_27 [1] : vector<8x128xf32> to vector<8xf32>
    %65 = vector.shape_cast %64 : vector<8xf32> to vector<8x1xf32>
    %66 = vector.broadcast %65 : vector<8x1xf32> to vector<8x128xf32>
    %67 = arith.subf %63, %66 : vector<8x128xf32>
    %68 = math.exp %67 : vector<8x128xf32>
    %cst_28 = arith.constant dense<0.000000e+00> : vector<8xf32>
    %69 = vector.multi_reduction <add>, %68, %cst_28 [1] : vector<8x128xf32> to vector<8xf32>
    %70 = vector.shape_cast %69 : vector<8xf32> to vector<8x1xf32>
    %71 = tpu.reciprocal %70 : vector<8x1xf32> -> vector<8x1xf32>
    %72 = vector.broadcast %71 : vector<8x1xf32> to vector<8x128xf32>
    %73 = arith.mulf %68, %72 : vector<8x128xf32>
    %74 = vector.extract_strided_slice %19 {offsets = [0, 256], sizes = [8, 128], strides = [1, 1]} : vector<8x384xf32> to vector<8x128xf32>
    %cst_29 = arith.constant dense<0.000000e+00> : vector<8xf32>
    %75 = vector.multi_reduction <add>, %74, %cst_29 [1] : vector<8x128xf32> to vector<8xf32>
    %76 = vector.shape_cast %75 : vector<8xf32> to vector<8x1xf32>
    %77 = arith.mulf %74, %74 : vector<8x128xf32>
    %cst_30 = arith.constant dense<0.000000e+00> : vector<8xf32>
    %78 = vector.multi_reduction <add>, %77, %cst_30 [1] : vector<8x128xf32> to vector<8xf32>
    %79 = vector.shape_cast %78 : vector<8xf32> to vector<8x1xf32>
    %cst_31 = arith.constant 7.812500e-03 : f32
    %80 = vector.broadcast %cst_31 : f32 to vector<8x1xf32>
    %81 = arith.mulf %76, %80 : vector<8x1xf32>
    %cst_32 = arith.constant 7.812500e-03 : f32
    %82 = vector.broadcast %cst_32 : f32 to vector<8x1xf32>
    %83 = arith.mulf %79, %82 : vector<8x1xf32>
    %84 = arith.mulf %81, %81 : vector<8x1xf32>
    %85 = arith.subf %83, %84 : vector<8x1xf32>
    %86 = vector.broadcast %81 : vector<8x1xf32> to vector<8x128xf32>
    %87 = arith.subf %74, %86 : vector<8x128xf32>
    %88 = math.rsqrt %85 : vector<8x1xf32>
    %89 = vector.broadcast %88 : vector<8x1xf32> to vector<8x128xf32>
    %90 = arith.mulf %87, %89 : vector<8x128xf32>
    %cst_33 = arith.constant dense<0xFF800000> : vector<8xf32>
    %91 = vector.multi_reduction <maximumf>, %90, %cst_33 [1] : vector<8x128xf32> to vector<8xf32>
    %92 = vector.shape_cast %91 : vector<8xf32> to vector<8x1xf32>
    %93 = vector.broadcast %92 : vector<8x1xf32> to vector<8x128xf32>
    %94 = arith.subf %90, %93 : vector<8x128xf32>
    %95 = math.exp %94 : vector<8x128xf32>
    %cst_34 = arith.constant dense<0.000000e+00> : vector<8xf32>
    %96 = vector.multi_reduction <add>, %95, %cst_34 [1] : vector<8x128xf32> to vector<8xf32>
    %97 = vector.shape_cast %96 : vector<8xf32> to vector<8x1xf32>
    %98 = tpu.reciprocal %97 : vector<8x1xf32> -> vector<8x1xf32>
    %99 = vector.broadcast %98 : vector<8x1xf32> to vector<8x128xf32>
    %100 = arith.mulf %95, %99 : vector<8x128xf32>
    %101 = tpu.concatenate %46, %73, %100 in 1 : vector<8x128xf32>, vector<8x128xf32>, vector<8x128xf32> -> vector<8x384xf32>
    %c0_35 = arith.constant 0 : index
    %c0_36 = arith.constant 0 : index
    %102 = vector.load %arg7[%c0_35, %c0_36] : memref<8x384xf32, #tpu.memory_space<vmem>>, vector<8x384xf32>
    tpu.vector_store %arg7[%c0_35, %c0_36], %101 {strides = array<i32>} : memref<8x384xf32, #tpu.memory_space<vmem>>, vector<8x384xf32>,
    return
  }
}

</mosaic_0001>

<llo_original>
// kernel: actor_forward.1
$region0: #{actor_forward.1}
  #allocation0 [shape = 'u32[]', space=smem, size = 0x4, offset = 0x4, fixed_abs, tag = 'smem constant byte address 0x4 - core index']
  #allocation1 [shape = 'u32[144,128]{1,0:T(1,128)}', space=vmem, size = 0x12000, scoped, tag = 'internal scratch']
  %s0 = inlined_call_operand.vmem [shape: f32[8,32], index: 0, kind: input, shape index: {}]
  %s1 = inlined_call_operand.vmem [shape: f32[32,128], index: 1, kind: input, shape index: {}]
  %s2 = inlined_call_operand.vmem [shape: f32[1,128], index: 2, kind: input, shape index: {}]
  %s3 = inlined_call_operand.vmem [shape: f32[128,128], index: 3, kind: input, shape index: {}]
  %s4 = inlined_call_operand.vmem [shape: f32[1,128], index: 4, kind: input, shape index: {}]
  %s5 = inlined_call_operand.vmem [shape: f32[128,384], index: 5, kind: input, shape index: {}]
  %s6 = inlined_call_operand.vmem [shape: f32[1,384], index: 6, kind: input, shape index: {}]
  %s7 = inlined_call_operand.hbm [shape: f32[8,384], index: 7, kind: output, shape index: {}]
  %s8 = sld [smem:[#allocation0]]
  $region38: #{actor_forward.1} parent=0
    _
  %s10 = ssub.s32 1, %s8
  %s11 = scalar_select 0, %s10, %s8
  $region1: #{actor_forward.1} parent=0
    #allocation2 [shape = 'u8[12288]{0}', space=vmem, size = 0x3000, scoped, tag = 'output window, operand 0, single buffered']
    #allocation3 [shape = 's32[1]{0}', space=sflag, size = 0x4, scoped, tag = 'scoped memory for actor_forward.1']
    %12 = vsyncpa [#allocation3], 0
    // Predicated region
    $region2: #{actor_forward.1} parent=1 // pred_check
      _
    $region3: #{actor_forward.1} parent=1 // pred_check_branch
      %14 = sbr.rel (0) target = $region5
    $region4: #{actor_forward.1} parent=1 // pred_region
      _
    $region5: #{actor_forward.1} parent=1 // pred_fallthru
      _
    // Predicated region
    $region6: #{actor_forward.1} parent=1 // pred_check
      _
    $region7: #{actor_forward.1} parent=1 // pred_check_branch
      %16 = sbr.rel (0) target = $region9
    $region8: #{actor_forward.1} parent=1 // pred_region
      _
    $region9: #{actor_forward.1} parent=1 // pred_fallthru
      _
    // Predicated region
    $region10: #{actor_forward.1} parent=1 // pred_check
      _
    $region11: #{actor_forward.1} parent=1 // pred_check_branch
      %18 = sbr.rel (0) target = $region13
    $region12: #{actor_forward.1} parent=1 // pred_region
      _
    $region13: #{actor_forward.1} parent=1 // pred_fallthru
      _
    // Predicated region
    $region14: #{actor_forward.1} parent=1 // pred_check
      _
    $region15: #{actor_forward.1} parent=1 // pred_check_branch
      %20 = sbr.rel (0) target = $region17
    $region16: #{actor_forward.1} parent=1 // pred_region
      _
    $region17: #{actor_forward.1} parent=1 // pred_fallthru
      _
    // Predicated region
    $region18: #{actor_forward.1} parent=1 // pred_check
      _
    $region19: #{actor_forward.1} parent=1 // pred_check_branch
      %22 = sbr.rel (0) target = $region21
    $region20: #{actor_forward.1} parent=1 // pred_region
      _
    $region21: #{actor_forward.1} parent=1 // pred_fallthru
      _
    // Predicated region
    $region22: #{actor_forward.1} parent=1 // pred_check
      _
    $region23: #{actor_forward.1} parent=1 // pred_check_branch
      %24 = sbr.rel (0) target = $region25
    $region24: #{actor_forward.1} parent=1 // pred_region
      _
    $region25: #{actor_forward.1} parent=1 // pred_fallthru
      _
    // Predicated region
    $region26: #{actor_forward.1} parent=1 // pred_check
      _
    $region27: #{actor_forward.1} parent=1 // pred_check_branch
      %26 = sbr.rel (0) target = $region29
    $region28: #{actor_forward.1} parent=1 // pred_region
      _
    $region29: #{actor_forward.1} parent=1 // pred_fallthru
      _
    %v27 = vld [vmem:[%s0] sm:$0xff]
    %v28 = vld [vmem:[%s1] sm:$0xff]
    %v29 = vld [vmem:[%s1 + $0x8] sm:$0xff]
    %v30 = vld [vmem:[%s1 + $0x10] sm:$0xff]
    %v31 = vld [vmem:[%s1 + $0x18] sm:$0xff]
    %v32 = vld [vmem:[%s2] sm:$0x1]
    %v34 = vlaneseq
    %v35 = vshrl.u32 %v34, 7
    %v36 = vsub.s32 0, %v35
    %v37 = vrot.slane %v32, %v36
    %vm39 = vcmask 261120
    %v41 = vsel %vm39, %v27, 0
    %43 = vmatprep.subr.mxu0 0.0
    %44 = vmatpush1.msra.mxu0 %v28
    %45 = vmatprep.subr.mxu0 0.0
    %46 = vmatpush1.msra.mxu0 %v29
    %47 = vmatprep.subr.mxu0 0.0
    %48 = vmatpush1.msra.mxu0 %v30
    %49 = vmatprep.subr.mxu0 0.0
    %50 = vmatpush1.msra.mxu0 %v31
    %51 = vmatprep.subr.mxu0 0.0
    %52 = vmatpush1.msra.mxu0 0.0
    %53 = vmatprep.subr.mxu0 0.0
    %54 = vmatpush1.msra.mxu0 0.0
    %55 = vmatprep.subr.mxu0 0.0
    %56 = vmatpush1.msra.mxu0 0.0
    %57 = vmatprep.subr.mxu0 0.0
    %58 = vmatpush1.msra.mxu0 0.0
    %59 = vmatprep.subr.mxu0 0.0
    %60 = vmatpush1.msra.mxu0 0.0
    %61 = vmatprep.subr.mxu0 0.0
    %62 = vmatpush1.msra.mxu0 0.0
    %63 = vmatprep.subr.mxu0 0.0
    %64 = vmatpush1.msra.mxu0 0.0
    %65 = vmatprep.subr.mxu0 0.0
    %66 = vmatpush1.msra.mxu0 0.0
    %67 = vmatprep.subr.mxu0 0.0
    %68 = vmatpush1.msra.mxu0 0.0
    %69 = vmatprep.subr.mxu0 0.0
    %70 = vmatpush1.msra.mxu0 0.0
    %71 = vmatprep.subr.mxu0 0.0
    %72 = vmatpush1.msra.mxu0 0.0
    %73 = vmatprep.subr.mxu0 0.0
    %74 = vmatpush1.msra.mxu0 0.0
    %75 = vmatprep.subr.mxu0 0.0
    %76 = vmatpush1.msra.mxu0 0.0
    %77 = vmatprep.subr.mxu0 0.0
    %78 = vmatpush1.msra.mxu0 0.0
    %79 = vmatprep.subr.mxu0 0.0
    %80 = vmatpush1.msra.mxu0 0.0
    %81 = vmatprep.subr.mxu0 0.0
    %82 = vmatpush1.msra.mxu0 0.0
    %83 = vmatprep.subr.mxu0 0.0
    %84 = vmatpush1.msra.mxu0 0.0
    %85 = vmatprep.subr.mxu0 0.0
    %86 = vmatpush1.msra.mxu0 0.0
    %87 = vmatprep.subr.mxu0 0.0
    %88 = vmatpush1.msra.mxu0 0.0
    %89 = vmatprep.subr.mxu0 0.0
    %90 = vmatpush1.msra.mxu0 0.0
    %91 = vmatprep.subr.mxu0 0.0
    %92 = vmatpush1.msra.mxu0 0.0
    %93 = vmatprep.subr.mxu0 0.0
    %94 = vmatpush1.msra.mxu0 0.0
    %95 = vmatprep.subr.mxu0 0.0
    %96 = vmatpush1.msra.mxu0 0.0
    %97 = vmatprep.subr.mxu0 0.0
    %98 = vmatpush1.msra.mxu0 0.0
    %99 = vmatprep.subr.mxu0 0.0
    %100 = vmatpush1.msra.mxu0 0.0
    %101 = vmatprep.subr.mxu0 0.0
    %102 = vmatpush1.msra.mxu0 0.0
    %103 = vmatprep.subr.mxu0 0.0
    %104 = vmatpush1.msra.mxu0 0.0
    %105 = vmatprep.subr.mxu0 0.0
    %106 = vmatpush1.msra.mxu0 0.0
    %107 = vmatprep.mubr.f32.mxu0 0.0
    %108 = vmatmul.mubr.f32.gmra.mrb[0].mxu0 %v41
    %v109 = vpop.f32.mrb[0].mxu0
    %v110 = vadd.f32 %v37, %v109
    %v111 = vpop.f32.mrb[0].mxu0
    %112 = vdwg.mxu0
    %v113 = vmax.f32 %v110, 0.0
    %v114 = vld [vmem:[%s3] sm:$0xff]
    %v115 = vld [vmem:[%s3 + $0x8] sm:$0xff]
    %v116 = vld [vmem:[%s3 + $0x10] sm:$0xff]
    %v117 = vld [vmem:[%s3 + $0x18] sm:$0xff]
    %v118 = vld [vmem:[%s3 + $0x20] sm:$0xff]
    %v119 = vld [vmem:[%s3 + $0x28] sm:$0xff]
    %v120 = vld [vmem:[%s3 + $0x30] sm:$0xff]
    %v121 = vld [vmem:[%s3 + $0x38] sm:$0xff]
    %v122 = vld [vmem:[%s3 + $0x40] sm:$0xff]
    %v123 = vld [vmem:[%s3 + $0x48] sm:$0xff]
    %v124 = vld [vmem:[%s3 + $0x50] sm:$0xff]
    %v125 = vld [vmem:[%s3 + $0x58] sm:$0xff]
    %v126 = vld [vmem:[%s3 + $0x60] sm:$0xff]
    %v127 = vld [vmem:[%s3 + $0x68] sm:$0xff]
    %v128 = vld [vmem:[%s3 + $0x70] sm:$0xff]
    %v129 = vld [vmem:[%s3 + $0x78] sm:$0xff]
    %v130 = vld [vmem:[%s4] sm:$0x1]
    %v132 = vlaneseq
    %v133 = vshrl.u32 %v132, 7
    %v134 = vsub.s32 0, %v133
    %v135 = vrot.slane %v130, %v134
    %137 = vmatprep.subr.mxu0 0.0
    %138 = vmatpush1.msra.mxu0 %v114
    %139 = vmatprep.subr.mxu0 0.0
    %140 = vmatpush1.msra.mxu0 %v115
    %141 = vmatprep.subr.mxu0 0.0
    %142 = vmatpush1.msra.mxu0 %v116
    %143 = vmatprep.subr.mxu0 0.0
    %144 = vmatpush1.msra.mxu0 %v117
    %145 = vmatprep.subr.mxu0 0.0
    %146 = vmatpush1.msra.mxu0 %v118
    %147 = vmatprep.subr.mxu0 0.0
    %148 = vmatpush1.msra.mxu0 %v119
    %149 = vmatprep.subr.mxu0 0.0
    %150 = vmatpush1.msra.mxu0 %v120
    %151 = vmatprep.subr.mxu0 0.0
    %152 = vmatpush1.msra.mxu0 %v121
    %153 = vmatprep.subr.mxu0 0.0
    %154 = vmatpush1.msra.mxu0 %v122
    %155 = vmatprep.subr.mxu0 0.0
    %156 = vmatpush1.msra.mxu0 %v123
    %157 = vmatprep.subr.mxu0 0.0
    %158 = vmatpush1.msra.mxu0 %v124
    %159 = vmatprep.subr.mxu0 0.0
    %160 = vmatpush1.msra.mxu0 %v125
    %161 = vmatprep.subr.mxu0 0.0
    %162 = vmatpush1.msra.mxu0 %v126
    %163 = vmatprep.subr.mxu0 0.0
    %164 = vmatpush1.msra.mxu0 %v127
    %165 = vmatprep.subr.mxu0 0.0
    %166 = vmatpush1.msra.mxu0 %v128
    %167 = vmatprep.subr.mxu0 0.0
    %168 = vmatpush1.msra.mxu0 %v129
    %169 = vmatprep.subr.mxu0 0.0
    %170 = vmatpush1.msra.mxu0 0.0
    %171 = vmatprep.subr.mxu0 0.0
    %172 = vmatpush1.msra.mxu0 0.0
    %173 = vmatprep.subr.mxu0 0.0
    %174 = vmatpush1.msra.mxu0 0.0
    %175 = vmatprep.subr.mxu0 0.0
    %176 = vmatpush1.msra.mxu0 0.0
    %177 = vmatprep.subr.mxu0 0.0
    %178 = vmatpush1.msra.mxu0 0.0
    %179 = vmatprep.subr.mxu0 0.0
    %180 = vmatpush1.msra.mxu0 0.0
    %181 = vmatprep.subr.mxu0 0.0
    %182 = vmatpush1.msra.mxu0 0.0
    %183 = vmatprep.subr.mxu0 0.0
    %184 = vmatpush1.msra.mxu0 0.0
    %185 = vmatprep.subr.mxu0 0.0
    %186 = vmatpush1.msra.mxu0 0.0
    %187 = vmatprep.subr.mxu0 0.0
    %188 = vmatpush1.msra.mxu0 0.0
    %189 = vmatprep.subr.mxu0 0.0
    %190 = vmatpush1.msra.mxu0 0.0
    %191 = vmatprep.subr.mxu0 0.0
    %192 = vmatpush1.msra.mxu0 0.0
    %193 = vmatprep.subr.mxu0 0.0
    %194 = vmatpush1.msra.mxu0 0.0
    %195 = vmatprep.subr.mxu0 0.0
    %196 = vmatpush1.msra.mxu0 0.0
    %197 = vmatprep.subr.mxu0 0.0
    %198 = vmatpush1.msra.mxu0 0.0
    %199 = vmatprep.subr.mxu0 0.0
    %200 = vmatpush1.msra.mxu0 0.0
    %201 = vmatprep.mubr.f32.mxu0 0.0
    %202 = vmatmul.mubr.f32.gmra.mrb[0].mxu0 %v113
    %v203 = vpop.f32.mrb[0].mxu0
    %v204 = vadd.f32 %v135, %v203
    %v205 = vpop.f32.mrb[0].mxu0
    %206 = vdwg.mxu0
    %v207 = vmax.f32 %v204, 0.0
    %v208 = vld [vmem:[%s5] sm:$0xff]
    %v209 = vld [vmem:[%s5 + $0x8] sm:$0xff]
    %v210 = vld [vmem:[%s5 + $0x10] sm:$0xff]
    %v211 = vld [vmem:[%s5 + $0x18] sm:$0xff]
    %v212 = vld [vmem:[%s5 + $0x20] sm:$0xff]
    %v213 = vld [vmem:[%s5 + $0x28] sm:$0xff]
    %v214 = vld [vmem:[%s5 + $0x30] sm:$0xff]
    %v215 = vld [vmem:[%s5 + $0x38] sm:$0xff]
    %v216 = vld [vmem:[%s5 + $0x40] sm:$0xff]
    %v217 = vld [vmem:[%s5 + $0x48] sm:$0xff]
    %v218 = vld [vmem:[%s5 + $0x50] sm:$0xff]
    %v219 = vld [vmem:[%s5 + $0x58] sm:$0xff]
    %v220 = vld [vmem:[%s5 + $0x60] sm:$0xff]
    %v221 = vld [vmem:[%s5 + $0x68] sm:$0xff]
    %v222 = vld [vmem:[%s5 + $0x70] sm:$0xff]
    %v223 = vld [vmem:[%s5 + $0x78] sm:$0xff]
    %v224 = vld [vmem:[%s5 + $0x80] sm:$0xff]
    %v225 = vld [vmem:[%s5 + $0x88] sm:$0xff]
    %v226 = vld [vmem:[%s5 + $0x90] sm:$0xff]
    %v227 = vld [vmem:[%s5 + $0x98] sm:$0xff]
    %v228 = vld [vmem:[%s5 + $0xa0] sm:$0xff]
    %v229 = vld [vmem:[%s5 + $0xa8] sm:$0xff]
    %v230 = vld [vmem:[%s5 + $0xb0] sm:$0xff]
    %v231 = vld [vmem:[%s5 + $0xb8] sm:$0xff]
    %v232 = vld [vmem:[%s5 + $0xc0] sm:$0xff]
    %v233 = vld [vmem:[%s5 + $0xc8] sm:$0xff]
    %v234 = vld [vmem:[%s5 + $0xd0] sm:$0xff]
    %v235 = vld [vmem:[%s5 + $0xd8] sm:$0xff]
    %v236 = vld [vmem:[%s5 + $0xe0] sm:$0xff]
    %v237 = vld [vmem:[%s5 + $0xe8] sm:$0xff]
    %v238 = vld [vmem:[%s5 + $0xf0] sm:$0xff]
    %v239 = vld [vmem:[%s5 + $0xf8] sm:$0xff]
    %v240 = vld [vmem:[%s5 + $0x100] sm:$0xff]
    %v241 = vld [vmem:[%s5 + $0x108] sm:$0xff]
    %v242 = vld [vmem:[%s5 + $0x110] sm:$0xff]
    %v243 = vld [vmem:[%s5 + $0x118] sm:$0xff]
    %v244 = vld [vmem:[%s5 + $0x120] sm:$0xff]
    %v245 = vld [vmem:[%s5 + $0x128] sm:$0xff]
    %v246 = vld [vmem:[%s5 + $0x130] sm:$0xff]
    %v247 = vld [vmem:[%s5 + $0x138] sm:$0xff]
    %v248 = vld [vmem:[%s5 + $0x140] sm:$0xff]
    %v249 = vld [vmem:[%s5 + $0x148] sm:$0xff]
    %v250 = vld [vmem:[%s5 + $0x150] sm:$0xff]
    %v251 = vld [vmem:[%s5 + $0x158] sm:$0xff]
    %v252 = vld [vmem:[%s5 + $0x160] sm:$0xff]
    %v253 = vld [vmem:[%s5 + $0x168] sm:$0xff]
    %v254 = vld [vmem:[%s5 + $0x170] sm:$0xff]
    %v255 = vld [vmem:[%s5 + $0x178] sm:$0xff]
    %v256 = vld [vmem:[%s6] sm:$0x7]
    %v258 = vlaneseq
    %v259 = vshrl.u32 %v258, 7
    %v260 = vsub.s32 0, %v259
    %v261 = vrot.slane %v256, %v260
    %v262 = vlaneseq
    %v263 = vshrl.u32 %v262, 7
    %v264 = vsub.s32 1, %v263
    %v265 = vrot.slane %v256, %v264
    %v266 = vlaneseq
    %v267 = vshrl.u32 %v266, 7
    %v268 = vsub.s32 2, %v267
    %v269 = vrot.slane %v256, %v268
    %273 = vmatprep.subr.mxu0 %v209
    %274 = vmatpush1.msra.mxu0 %v208
    %275 = vmatprep.subr.mxu0 %v212
    %276 = vmatpush1.msra.mxu0 %v211
    %277 = vmatprep.subr.mxu0 %v215
    %278 = vmatpush1.msra.mxu0 %v214
    %279 = vmatprep.subr.mxu0 %v218
    %280 = vmatpush1.msra.mxu0 %v217
    %281 = vmatprep.subr.mxu0 %v221
    %282 = vmatpush1.msra.mxu0 %v220
    %283 = vmatprep.subr.mxu0 %v224
    %284 = vmatpush1.msra.mxu0 %v223
    %285 = vmatprep.subr.mxu0 %v227
    %286 = vmatpush1.msra.mxu0 %v226
    %287 = vmatprep.subr.mxu0 %v230
    %288 = vmatpush1.msra.mxu0 %v229
    %289 = vmatprep.subr.mxu0 %v233
    %290 = vmatpush1.msra.mxu0 %v232
    %291 = vmatprep.subr.mxu0 %v236
    %292 = vmatpush1.msra.mxu0 %v235
    %293 = vmatprep.subr.mxu0 %v239
    %294 = vmatpush1.msra.mxu0 %v238
    %295 = vmatprep.subr.mxu0 %v242
    %296 = vmatpush1.msra.mxu0 %v241
    %297 = vmatprep.subr.mxu0 %v245
    %298 = vmatpush1.msra.mxu0 %v244
    %299 = vmatprep.subr.mxu0 %v248
    %300 = vmatpush1.msra.mxu0 %v247
    %301 = vmatprep.subr.mxu0 %v251
    %302 = vmatpush1.msra.mxu0 %v250
    %303 = vmatprep.subr.mxu0 %v254
    %304 = vmatpush1.msra.mxu0 %v253
    %305 = vmatprep.subr.mxu0 0.0
    %306 = vmatpush1.msra.mxu0 0.0
    %307 = vmatprep.subr.mxu0 0.0
    %308 = vmatpush1.msra.mxu0 0.0
    %309 = vmatprep.subr.mxu0 0.0
    %310 = vmatpush1.msra.mxu0 0.0
    %311 = vmatprep.subr.mxu0 0.0
    %312 = vmatpush1.msra.mxu0 0.0
    %313 = vmatprep.subr.mxu0 0.0
    %314 = vmatpush1.msra.mxu0 0.0
    %315 = vmatprep.subr.mxu0 0.0
    %316 = vmatpush1.msra.mxu0 0.0
    %317 = vmatprep.subr.mxu0 0.0
    %318 = vmatpush1.msra.mxu0 0.0
    %319 = vmatprep.subr.mxu0 0.0
    %320 = vmatpush1.msra.mxu0 0.0
    %321 = vmatprep.subr.mxu0 0.0
    %322 = vmatpush1.msra.mxu0 0.0
    %323 = vmatprep.subr.mxu0 0.0
    %324 = vmatpush1.msra.mxu0 0.0
    %325 = vmatprep.subr.mxu0 0.0
    %326 = vmatpush1.msra.mxu0 0.0
    %327 = vmatprep.subr.mxu0 0.0
    %328 = vmatpush1.msra.mxu0 0.0
    %329 = vmatprep.subr.mxu0 0.0
    %330 = vmatpush1.msra.mxu0 0.0
    %331 = vmatprep.subr.mxu0 0.0
    %332 = vmatpush1.msra.mxu0 0.0
    %333 = vmatprep.subr.mxu0 0.0
    %334 = vmatpush1.msra.mxu0 0.0
    %335 = vmatprep.subr.mxu0 0.0
    %336 = vmatpush1.msra.mxu0 0.0
    %337 = vmatprep.mubr.f32.mxu0 0.0
    %338 = vmatmul.mubr.f32.gmra.mrb[0].mxu0 %v207
    %v339 = vpop.f32.mrb[0].mxu0
    %v340 = vadd.f32 %v261, %v339
    %v341 = vpop.f32.mrb[0].mxu0
    %v342 = vadd.f32 %v265, %v341
    %343 = vdwg.mxu0
    %344 = vmatprep.subr.mxu0 0.0
    %345 = vmatpush1.msra.mxu0 %v210
    %346 = vmatprep.subr.mxu0 0.0
    %347 = vmatpush1.msra.mxu0 %v213
    %348 = vmatprep.subr.mxu0 0.0
    %349 = vmatpush1.msra.mxu0 %v216
    %350 = vmatprep.subr.mxu0 0.0
    %351 = vmatpush1.msra.mxu0 %v219
    %352 = vmatprep.subr.mxu0 0.0
    %353 = vmatpush1.msra.mxu0 %v222
    %354 = vmatprep.subr.mxu0 0.0
    %355 = vmatpush1.msra.mxu0 %v225
    %356 = vmatprep.subr.mxu0 0.0
    %357 = vmatpush1.msra.mxu0 %v228
    %358 = vmatprep.subr.mxu0 0.0
    %359 = vmatpush1.msra.mxu0 %v231
    %360 = vmatprep.subr.mxu0 0.0
    %361 = vmatpush1.msra.mxu0 %v234
    %362 = vmatprep.subr.mxu0 0.0
    %363 = vmatpush1.msra.mxu0 %v237
    %364 = vmatprep.subr.mxu0 0.0
    %365 = vmatpush1.msra.mxu0 %v240
    %366 = vmatprep.subr.mxu0 0.0
    %367 = vmatpush1.msra.mxu0 %v243
    %368 = vmatprep.subr.mxu0 0.0
    %369 = vmatpush1.msra.mxu0 %v246
    %370 = vmatprep.subr.mxu0 0.0
    %371 = vmatpush1.msra.mxu0 %v249
    %372 = vmatprep.subr.mxu0 0.0
    %373 = vmatpush1.msra.mxu0 %v252
    %374 = vmatprep.subr.mxu0 0.0
    %375 = vmatpush1.msra.mxu0 %v255
    %376 = vmatprep.subr.mxu0 0.0
    %377 = vmatpush1.msra.mxu0 0.0
    %378 = vmatprep.subr.mxu0 0.0
    %379 = vmatpush1.msra.mxu0 0.0
    %380 = vmatprep.subr.mxu0 0.0
    %381 = vmatpush1.msra.mxu0 0.0
    %382 = vmatprep.subr.mxu0 0.0
    %383 = vmatpush1.msra.mxu0 0.0
    %384 = vmatprep.subr.mxu0 0.0
    %385 = vmatpush1.msra.mxu0 0.0
    %386 = vmatprep.subr.mxu0 0.0
    %387 = vmatpush1.msra.mxu0 0.0
    %388 = vmatprep.subr.mxu0 0.0
    %389 = vmatpush1.msra.mxu0 0.0
    %390 = vmatprep.subr.mxu0 0.0
    %391 = vmatpush1.msra.mxu0 0.0
    %392 = vmatprep.subr.mxu0 0.0
    %393 = vmatpush1.msra.mxu0 0.0
    %394 = vmatprep.subr.mxu0 0.0
    %395 = vmatpush1.msra.mxu0 0.0
    %396 = vmatprep.subr.mxu0 0.0
    %397 = vmatpush1.msra.mxu0 0.0
    %398 = vmatprep.subr.mxu0 0.0
    %399 = vmatpush1.msra.mxu0 0.0
    %400 = vmatprep.subr.mxu0 0.0
    %401 = vmatpush1.msra.mxu0 0.0
    %402 = vmatprep.subr.mxu0 0.0
    %403 = vmatpush1.msra.mxu0 0.0
    %404 = vmatprep.subr.mxu0 0.0
    %405 = vmatpush1.msra.mxu0 0.0
    %406 = vmatprep.subr.mxu0 0.0
    %407 = vmatpush1.msra.mxu0 0.0
    %408 = vmatprep.mubr.f32.mxu0 0.0
    %409 = vmatmul.mubr.f32.gmra.mrb[0].mxu0 %v207
    %v410 = vpop.f32.mrb[0].mxu0
    %v411 = vadd.f32 %v269, %v410
    %v412 = vpop.f32.mrb[0].mxu0
    %413 = vdwg.mxu0
    %414 = vadd.xlane.f32.xlu0 %v340
    %v415 = vpop.xlane.xlu0 %414
    %v416 = vmul.f32 %v340, %v340
    %417 = vadd.xlane.f32.xlu0 %v416
    %v418 = vpop.xlane.xlu0 %417
    %v419 = vmul.f32 %v415, 0.0078125
    %v420 = vmul.f32 %v418, 0.0078125
    %v421 = vmul.f32 %v419, %v419
    %v422 = vsub.f32 %v420, %v421
    %v423 = vsub.f32 %v340, %v419
    %v424 = vrsqrt.pop %v422
    %v425 = vmul.f32 %v423, %v424
    %426 = vmax.xlane.f32.xlu0 %v425
    %v427 = vpop.xlane.xlu0 %426
    %v428 = vsub.f32 %v425, %v427
    %v429 = vmul.f32 %v428, 1.442695
    %v430 = vpow.pop %v429
    %431 = vadd.xlane.f32.xlu0 %v430
    %v432 = vpop.xlane.xlu0 %431
    %v433 = vrcp.pop %v432
    %v434 = vmul.f32 %v430, %v433
    %435 = vadd.xlane.f32.xlu0 %v342
    %v436 = vpop.xlane.xlu0 %435
    %v437 = vmul.f32 %v342, %v342
    %438 = vadd.xlane.f32.xlu0 %v437
    %v439 = vpop.xlane.xlu0 %438
    %v440 = vmul.f32 %v436, 0.0078125
    %v441 = vmul.f32 %v439, 0.0078125
    %v442 = vmul.f32 %v440, %v440
    %v443 = vsub.f32 %v441, %v442
    %v444 = vsub.f32 %v342, %v440
    %v445 = vrsqrt.pop %v443
    %v446 = vmul.f32 %v444, %v445
    %447 = vmax.xlane.f32.xlu0 %v446
    %v448 = vpop.xlane.xlu0 %447
    %v449 = vsub.f32 %v446, %v448
    %v450 = vmul.f32 %v449, 1.442695
    %v451 = vpow.pop %v450
    %452 = vadd.xlane.f32.xlu0 %v451
    %v453 = vpop.xlane.xlu0 %452
    %v454 = vrcp.pop %v453
    %v455 = vmul.f32 %v451, %v454
    %456 = vadd.xlane.f32.xlu0 %v411
    %v457 = vpop.xlane.xlu0 %456
    %v458 = vmul.f32 %v411, %v411
    %459 = vadd.xlane.f32.xlu0 %v458
    %v460 = vpop.xlane.xlu0 %459
    %v461 = vmul.f32 %v457, 0.0078125
    %v462 = vmul.f32 %v460, 0.0078125
    %v463 = vmul.f32 %v461, %v461
    %v464 = vsub.f32 %v462, %v463
    %v465 = vsub.f32 %v411, %v461
    %v466 = vrsqrt.pop %v464
    %v467 = vmul.f32 %v465, %v466
    %468 = vmax.xlane.f32.xlu0 %v467
    %v469 = vpop.xlane.xlu0 %468
    %v470 = vsub.f32 %v467, %v469
    %v471 = vmul.f32 %v470, 1.442695
    %v472 = vpow.pop %v471
    %473 = vadd.xlane.f32.xlu0 %v472
    %v474 = vpop.xlane.xlu0 %473
    %v475 = vrcp.pop %v474
    %v476 = vmul.f32 %v472, %v475
    %477 = vst [vmem:[#allocation2] sm:$0xff] %v434
    %478 = vst [vmem:[#allocation2 + $0x8] sm:$0xff] %v455
    %479 = vst [vmem:[#allocation2 + $0x10] sm:$0xff] %v476
    // Predicated region
    $region30: #{actor_forward.1} parent=1 // pred_check
      _
    $region31: #{actor_forward.1} parent=1 // pred_check_branch
      %481 = sbr.rel (0) target = $region33
    $region32: #{actor_forward.1} parent=1 // pred_region
      %s483 = ssub.s32 384, 384
      %484 = vsyncadd [#allocation3], %s483
      %s486 = sshll.u32 [#allocation2], 4
      %s487 = int_to_ptr.vmem [resolvable:$true] %s486
      %489 = dma.vmem_to_hbm [thread:$0]  %s487, 384, %s7, [#allocation3]
    $region33: #{actor_forward.1} parent=1 // pred_fallthru
      _
    // Predicated region
    $region34: #{actor_forward.1} parent=1 // pred_check
      _
    $region35: #{actor_forward.1} parent=1 // pred_check_branch
      %491 = sbr.rel (0) target = $region37
    $region36: #{actor_forward.1} parent=1 // pred_region
      %492 = dma.done [#allocation3], 384
    $region37: #{actor_forward.1} parent=1 // pred_fallthru
      _
    %493 = vsyncpa [#allocation3], 1

</llo_original>
